<compile_context>
chip_gen: v7x
topology: tpu7x:2x2x1
jax: 0.10.0
libtpu: 0.0.40
codegen_flags: <defaults>
</compile_context>

<pallas_src>
import functools

import jax
import jax.numpy as jnp
from jax.experimental import pallas as pl
from jax.experimental.pallas import tpu as pltpu


def _per_pixel_kernel(x_ref, t_ref, prob_ref, nll_ref, *, ignore_index):
    """Per (batch, pixel-tile) block.

    x_ref:    (C, T) logits
    t_ref:    (1, T) int32 targets
    prob_ref: (1, T) f32 softmax prob of the target class (1.0 for ignored)
    nll_ref:  (1, T) f32 -log softmax at the target class
    """
    x = x_ref[...].astype(jnp.float32)                      # (C, T)
    t = t_ref[...]                                          # (1, T)
    valid = t != ignore_index                               # (1, T) bool

    cls = jax.lax.broadcasted_iota(jnp.int32, x.shape, 0)   # (C, T)
    onehot = (cls == t).astype(jnp.float32)                 # all-zero for ignored

    # numerically stable log-sum-exp over the channel (sublane) axis
    m = jnp.max(x, axis=0, keepdims=True)                   # (1, T)
    s = jnp.sum(jnp.exp(x - m), axis=0, keepdims=True)      # (1, T)
    lse = m + jnp.log(s)

    x_t = jnp.sum(x * onehot, axis=0, keepdims=True)        # target-class logit
    nll = lse - x_t                                         # -log p_t

    nll_ref[...] = nll
    # OHEM score = softmax prob of the target class; ignored pixels forced to 1
    # (matches `prob.masked_fill_(~valid_mask, 1)` in the PyTorch reference).
    prob_ref[...] = jnp.where(valid, jnp.exp(-nll), 1.0)


def _pick_tile(hw, tile_hw):
    if hw <= tile_hw:
        return hw                                  # full extent: always legal
    return max((tile_hw // 128) * 128, 128)        # lane dim multiple of 128


def prob_ohem_cross_entropy_2d(inputs, targets, weight, *,
                               ignore_index, thresh=0.6, min_kept=256,
                               tile_hw=2048):
    b, c, h, w = inputs.shape
    hw = h * w
    n = b * hw

    tile = _pick_tile(hw, tile_hw)
    grid = (b, pl.cdiv(hw, tile))          # partial tail tile handled by Pallas
                                           # (OOB reads unused, OOB writes dropped)

    x3 = inputs.reshape(b, c, hw)                         # free reshape of NCHW
    t3 = targets.reshape(b, 1, hw).astype(jnp.int32)

    prob_t, nll = pl.pallas_call(
        functools.partial(_per_pixel_kernel, ignore_index=ignore_index),
        out_shape=[jax.ShapeDtypeStruct((b, 1, hw), jnp.float32)] * 2,
        grid_spec=pltpu.PrefetchScalarGridSpec(
            num_scalar_prefetch=0, grid=grid,
            in_specs=[
                pl.BlockSpec((pl.Squeezed(), c, tile), lambda bi, i: (bi, 0, i)),
                pl.BlockSpec((pl.Squeezed(), 1, tile), lambda bi, i: (bi, 0, i)),
            ],
            out_specs=[
                pl.BlockSpec((pl.Squeezed(), 1, tile), lambda bi, i: (bi, 0, i)),
            ] * 2,
        ),
        compiler_params=pltpu.CompilerParams(
            dimension_semantics=("parallel", "parallel")),
    )(x3, t3)

    prob_flat = prob_t.reshape(n)
    nll_flat = nll.reshape(n)
    t_flat = targets.reshape(n).astype(jnp.int32)
    valid = t_flat != ignore_index
    num_valid = jnp.sum(valid.astype(jnp.int32))

    # per-pixel class weight: cheap length-C table gather in XLA
    wvec = weight.astype(jnp.float32).reshape(c)
    wsel = wvec[jnp.where(valid, t_flat, 0)]

    if int(min_kept) > 0:
        k = min(n, int(min_kept))
        # k-th smallest OHEM score via top_k of the negated scores (no full sort)
        thr_val = -jax.lax.top_k(-prob_flat, k)[0][k - 1]
        threshold = jnp.maximum(thr_val, jnp.float32(thresh))
        kept = prob_flat <= threshold
        apply_ohem = jnp.int32(min_kept) <= num_valid      # data-dependent branch
        final_keep = jnp.where(apply_ohem, valid & kept, valid)
    else:
        final_keep = valid

    # weighted mean over kept & valid pixels (torch CE mean + weight + ignore);
    # fused XLA reduction -- reduce kernel dropped per perf review.
    keepf = final_keep.astype(jnp.float32)
    num = jnp.sum(keepf * wsel * nll_flat)
    den = jnp.sum(keepf * wsel)
    # guard den == 0 (everything ignored) instead of propagating NaN
    return jnp.where(den > 0, num / den, jnp.float32(0.0))


if __name__ == "__main__":
    key = jax.random.PRNGKey(0)
    b, c, h, w = 2, 4, 16, 16
    ignore_index = 255

    k1, k2, k3 = jax.random.split(key, 3)
    logits = jax.random.normal(k1, (b, c, h, w), dtype=jnp.float32)
    targets = jax.random.randint(k2, (b, h, w), 0, c, dtype=jnp.int32)
    ignore_mask = jax.random.uniform(k3, (b, h, w)) < 0.1
    targets = jnp.where(ignore_mask, jnp.int32(ignore_index), targets)

    # deterministic synthetic class weights (module requires a weight tensor)
    weight = jnp.linspace(0.5, 1.5, c, dtype=jnp.float32)

    loss = prob_ohem_cross_entropy_2d(
        logits, targets, weight,
        ignore_index=ignore_index, thresh=0.6, min_kept=256)
    jax.block_until_ready(loss)
    print("KERNEL_OK")
</pallas_src>

<mosaic_0001>
module attributes {stable_mosaic.version = 11 : i64} {
  func.func @_per_pixel_kernel(%arg0: i32, %arg1: i32, %arg2: memref<1x4x256xf32, #tpu.memory_space<vmem>>, %arg3: memref<1x1x256xi32, #tpu.memory_space<vmem>>, %arg4: memref<1x1x256xf32, #tpu.memory_space<vmem>>, %arg5: memref<1x1x256xf32, #tpu.memory_space<vmem>>) attributes {dimension_semantics = [#tpu.dimension_semantics<parallel>, #tpu.dimension_semantics<parallel>], iteration_bounds = array<i64: 2, 1>, scalar_prefetch = 0 : i64, scratch_operands = 0 : i64, tpu.core_type = #tpu.core_type<tc>, window_params = [{transform_indices = @transform_0, window_bounds = array<i64: 1, 4, 256>}, {transform_indices = @transform_1, window_bounds = array<i64: 1, 1, 256>}, {transform_indices = @transform_2, window_bounds = array<i64: 1, 1, 256>}, {transform_indices = @transform_3, window_bounds = array<i64: 1, 1, 256>}]} {
    %c0 = arith.constant 0 : index
    %c0_0 = arith.constant 0 : index
    %c0_1 = arith.constant 0 : index
    %0 = vector.load %arg2[%c0, %c0_0, %c0_1] : memref<1x4x256xf32, #tpu.memory_space<vmem>>, vector<1x4x256xf32>
    %1 = vector.shape_cast %0 : vector<1x4x256xf32> to vector<4x256xf32>
    %c0_2 = arith.constant 0 : index
    %c0_3 = arith.constant 0 : index
    %c0_4 = arith.constant 0 : index
    %2 = vector.load %arg3[%c0_2, %c0_3, %c0_4] : memref<1x1x256xi32, #tpu.memory_space<vmem>>, vector<1x1x256xi32>
    %3 = vector.shape_cast %2 : vector<1x1x256xi32> to vector<1x256xi32>
    %c255_i32 = arith.constant 255 : i32
    %4 = vector.broadcast %c255_i32 : i32 to vector<1x256xi32>
    %5 = arith.cmpi ne, %3, %4 : vector<1x256xi32>
    %6 = tpu.iota {dimensions = array<i32: 0>} : vector<4x256xi32>
    %7 = vector.broadcast %3 : vector<1x256xi32> to vector<4x256xi32>
    %8 = arith.cmpi eq, %6, %7 : vector<4x256xi32>
    %9 = arith.extui %8 : vector<4x256xi1> to vector<4x256xi32>
    %10 = arith.sitofp %9 : vector<4x256xi32> to vector<4x256xf32>
    %cst = arith.constant dense<0xFF800000> : vector<256xf32>
    %11 = vector.multi_reduction <maximumf>, %1, %cst [0] : vector<4x256xf32> to vector<256xf32>
    %12 = vector.shape_cast %11 : vector<256xf32> to vector<1x256xf32>
    %13 = vector.broadcast %12 : vector<1x256xf32> to vector<4x256xf32>
    %14 = arith.subf %1, %13 : vector<4x256xf32>
    %15 = math.exp %14 : vector<4x256xf32>
    %cst_5 = arith.constant dense<0.000000e+00> : vector<256xf32>
    %16 = vector.multi_reduction <add>, %15, %cst_5 [0] : vector<4x256xf32> to vector<256xf32>
    %17 = vector.shape_cast %16 : vector<256xf32> to vector<1x256xf32>
    %18 = math.log %17 : vector<1x256xf32>
    %19 = arith.addf %12, %18 : vector<1x256xf32>
    %20 = arith.mulf %1, %10 : vector<4x256xf32>
    %cst_6 = arith.constant dense<0.000000e+00> : vector<256xf32>
    %21 = vector.multi_reduction <add>, %20, %cst_6 [0] : vector<4x256xf32> to vector<256xf32>
    %22 = vector.shape_cast %21 : vector<256xf32> to vector<1x256xf32>
    %23 = arith.subf %19, %22 : vector<1x256xf32>
    %c0_7 = arith.constant 0 : index
    %c0_8 = arith.constant 0 : index
    %c0_9 = arith.constant 0 : index
    %24 = vector.load %arg5[%c0_7, %c0_8, %c0_9] : memref<1x1x256xf32, #tpu.memory_space<vmem>>, vector<1x1x256xf32>
    %25 = vector.shape_cast %24 : vector<1x1x256xf32> to vector<1x256xf32>
    %26 = vector.shape_cast %23 : vector<1x256xf32> to vector<1x1x256xf32>
    tpu.vector_store %arg5[%c0_7, %c0_8, %c0_9], %26 {strides = array<i32>} : memref<1x1x256xf32, #tpu.memory_space<vmem>>, vector<1x1x256xf32>,
    %cst_10 = arith.constant 0.000000e+00 : f32
    %27 = vector.broadcast %cst_10 : f32 to vector<1x256xf32>
    %28 = arith.subf %27, %23 : vector<1x256xf32>
    %29 = math.exp %28 : vector<1x256xf32>
    %cst_11 = arith.constant 1.000000e+00 : f32
    %30 = vector.broadcast %cst_11 : f32 to vector<1x256xf32>
    %31 = arith.select %5, %29, %30 : vector<1x256xi1>, vector<1x256xf32>
    %c0_12 = arith.constant 0 : index
    %c0_13 = arith.constant 0 : index
    %c0_14 = arith.constant 0 : index
    %32 = vector.load %arg4[%c0_12, %c0_13, %c0_14] : memref<1x1x256xf32, #tpu.memory_space<vmem>>, vector<1x1x256xf32>
    %33 = vector.shape_cast %32 : vector<1x1x256xf32> to vector<1x256xf32>
    %34 = vector.shape_cast %31 : vector<1x256xf32> to vector<1x1x256xf32>
    tpu.vector_store %arg4[%c0_12, %c0_13, %c0_14], %34 {strides = array<i32>} : memref<1x1x256xf32, #tpu.memory_space<vmem>>, vector<1x1x256xf32>,
    return
  }
  func.func @transform_0(%arg0: i32, %arg1: i32) -> (i32, i32, i32) {
    %c0_i32 = arith.constant 0 : i32
    %c0_i32_0 = arith.constant 0 : i32
    return %arg0, %c0_i32, %arg1 : i32, i32, i32
  }
  func.func @transform_1(%arg0: i32, %arg1: i32) -> (i32, i32, i32) {
    %c0_i32 = arith.constant 0 : i32
    %c0_i32_0 = arith.constant 0 : i32
    return %arg0, %c0_i32, %arg1 : i32, i32, i32
  }
  func.func @transform_2(%arg0: i32, %arg1: i32) -> (i32, i32, i32) {
    %c0_i32 = arith.constant 0 : i32
    %c0_i32_0 = arith.constant 0 : i32
    return %arg0, %c0_i32, %arg1 : i32, i32, i32
  }
  func.func @transform_3(%arg0: i32, %arg1: i32) -> (i32, i32, i32) {
    %c0_i32 = arith.constant 0 : i32
    %c0_i32_0 = arith.constant 0 : i32
    return %arg0, %c0_i32, %arg1 : i32, i32, i32
  }
}

</mosaic_0001>

<llo_original>
// kernel: tpu_custom_call.1
$region0: #{tpu_custom_call.1}
  #allocation0 [shape = 'u32[]', space=smem, size = 0x4, offset = 0x4, fixed_abs, tag = 'smem constant byte address 0x4 - core index']
  #allocation1 [shape = 'u32[144,128]{1,0:T(1,128)}', space=vmem, size = 0x12000, scoped, tag = 'internal scratch']
  %s0 = inlined_call_operand.hbm [shape: f32[2,4,256], index: 0, kind: input, shape index: {}]
  %s1 = inlined_call_operand.hbm [shape: s32[2,1,256], index: 1, kind: input, shape index: {}]
  %s2 = inlined_call_operand.hbm [shape: f32[2,1,256], index: 2, kind: output, shape index: {0}]
  %s3 = inlined_call_operand.hbm [shape: f32[2,1,256], index: 3, kind: output, shape index: {1}]
  %4 = xla_tuple %s2, %s3
  %s5 = sld [smem:[#allocation0]]
  $region57: #{tpu_custom_call.1} parent=0
    _
  %s7 = ssub.s32 1, %s5
  %s8 = scalar_select 0, %s7, %s5
  $region1: #{tpu_custom_call.1} parent=0
    #allocation2 [shape = 'u8[8192]{0}', space=vmem, size = 0x2000, scoped, tag = 'input window, operand 0']
    #allocation3 [shape = 's32[2]{0}', space=sflag, size = 0x8, scoped, tag = 'scoped memory for tpu_custom_call.1']
    #allocation4 [shape = 's32[2]{0}', space=sflag, size = 0x8, scoped, tag = 'scoped memory for tpu_custom_call.1']
    #allocation5 [shape = 'u8[2048]{0}', space=vmem, size = 0x800, scoped, tag = 'input window, operand 1']
    #allocation6 [shape = 's32[2]{0}', space=sflag, size = 0x8, scoped, tag = 'scoped memory for tpu_custom_call.1']
    #allocation7 [shape = 'u8[2048]{0}', space=vmem, size = 0x800, scoped, tag = 'output window, operand 0']
    #allocation8 [shape = 'u8[2048]{0}', space=vmem, size = 0x800, scoped, tag = 'output window, operand 1']
    #allocation9 [shape = 's32[2]{0}', space=sflag, size = 0x8, scoped, tag = 'scoped memory for tpu_custom_call.1']
    %9 = vsyncpa [#allocation3], 0
    %s10 = scalar_lea.sflag [#allocation3], 1
    %11 = vsyncpa %s10, 0
    %12 = vsyncpa [#allocation6], 0
    %s13 = scalar_lea.sflag [#allocation6], 1
    %14 = vsyncpa %s13, 0
    %15 = vsyncpa [#allocation4], 0
    %s16 = scalar_lea.sflag [#allocation4], 1
    %17 = vsyncpa %s16, 0
    %18 = vsyncpa [#allocation9], 0
    %s19 = scalar_lea.sflag [#allocation9], 1
    %20 = vsyncpa %s19, 0
    loop: start=0, step=1, limit=4
    $region2: #{tpu_custom_call.1} parent=1 // loop_pre_header
      _
    $region3: #{tpu_custom_call.1} parent=1 // loop_header
      %s22 = sphi 0, %s26
      %p23 = scmp.ge.s32.totalorder %s22, 4
      %s29 = sphi 0, %s41
      %s30 = sphi 0, %s37
      %s31 = sphi 0, %s29
      %s32 = sphi 0, %s30
      %s33 = sphi 0, %s31
      %s34 = sphi 0, %s32
      %s46 = sphi 0, %s48
      %s49 = sphi 0, %s46
      %s50 = sphi 0, %s49
      %s66 = sphi 0, %s50
      %s74 = sphi 0, %s76
      %s77 = sphi 0, %s74
      %s78 = sphi 0, %s77
      %s94 = sphi 0, %s78
      %s102 = sphi 0, %s104
      %s105 = sphi 0, %s102
      %s106 = sphi 0, %s105
      %s122 = sphi 0, %s106
      %s130 = sphi 0, %s132
      %s133 = sphi 0, %s130
      %s134 = sphi 0, %s133
      %s150 = sphi 0, %s134
    $region4: #{tpu_custom_call.1} parent=1 // loop_header_branch
      %25 = sbr.rel (%p23) target = $region8
    $region5: #{tpu_custom_call.1} parent=1 // loop_body
      %s27 = ssub.s32 %s22, 1
      %s28 = ssub.s32 %s22, 2
      %s35 = sadd.s32 1, %s30
      %p36 = scmp.ge.s32.totalorder %s35, 1
      %s37 = scalar_select %p36, 0, %s35
      %s38 = sadd.s32 1, %s29
      %s39 = scalar_select %p36, %s38, %s29
      %p40 = scmp.ge.s32.totalorder %s39, 2
      %s41 = scalar_select %p40, 0, %s39
      %s42 = ssub.s32 %s29, %s41
      %s43 = ssub.s32 %s30, %s37
      %s44 = sor.u32 %s42, %s43
      %p45 = scmp.eq.s32.totalorder %s44, 0
      %s47 = sadd.s32 %s46, 1
      %s48 = scalar_select %p45, %s46, %s47
      %p51 = pneg %p45
      %p52 = scmp.eq.s32.totalorder %s22, 1
      %p53 = por %p51, %p52
      %p54 = scmp.ne.s32.totalorder %s46, %s49
      %p55 = scmp.eq.s32.totalorder %s22, 0
      %p56 = por %p54, %p55
      %p57 = scmp.ne.s32.totalorder %s46, %s49
      %p58 = scmp.eq.s32.totalorder %s27, 1
      %p59 = por %p57, %p58
      %p60 = scmp.ne.s32.totalorder %s49, %s50
      %p61 = scmp.eq.s32.totalorder %s27, 0
      %p62 = por %p60, %p61
      %p63 = scmp.ne.s32.totalorder %s49, %s50
      %p64 = scmp.eq.s32.totalorder %s28, 1
      %p65 = por %p63, %p64
      %p67 = scmp.ne.s32.totalorder %s50, %s66
      %p68 = scmp.eq.s32.totalorder %s28, 0
      %p69 = por %p67, %p68
      %s70 = ssub.s32 %s29, %s41
      %s71 = ssub.s32 %s30, %s37
      %s72 = sor.u32 %s70, %s71
      %p73 = scmp.eq.s32.totalorder %s72, 0
      %s75 = sadd.s32 %s74, 1
      %s76 = scalar_select %p73, %s74, %s75
      %p79 = pneg %p73
      %p80 = scmp.eq.s32.totalorder %s22, 1
      %p81 = por %p79, %p80
      %p82 = scmp.ne.s32.totalorder %s74, %s77
      %p83 = scmp.eq.s32.totalorder %s22, 0
      %p84 = por %p82, %p83
      %p85 = scmp.ne.s32.totalorder %s74, %s77
      %p86 = scmp.eq.s32.totalorder %s27, 1
      %p87 = por %p85, %p86
      %p88 = scmp.ne.s32.totalorder %s77, %s78
      %p89 = scmp.eq.s32.totalorder %s27, 0
      %p90 = por %p88, %p89
      %p91 = scmp.ne.s32.totalorder %s77, %s78
      %p92 = scmp.eq.s32.totalorder %s28, 1
      %p93 = por %p91, %p92
      %p95 = scmp.ne.s32.totalorder %s78, %s94
      %p96 = scmp.eq.s32.totalorder %s28, 0
      %p97 = por %p95, %p96
      %s98 = ssub.s32 %s29, %s41
      %s99 = ssub.s32 %s30, %s37
      %s100 = sor.u32 %s98, %s99
      %p101 = scmp.eq.s32.totalorder %s100, 0
      %s103 = sadd.s32 %s102, 1
      %s104 = scalar_select %p101, %s102, %s103
      %p107 = pneg %p101
      %p108 = scmp.eq.s32.totalorder %s22, 1
      %p109 = por %p107, %p108
      %p110 = scmp.ne.s32.totalorder %s102, %s105
      %p111 = scmp.eq.s32.totalorder %s22, 0
      %p112 = por %p110, %p111
      %p113 = scmp.ne.s32.totalorder %s102, %s105
      %p114 = scmp.eq.s32.totalorder %s27, 1
      %p115 = por %p113, %p114
      %p116 = scmp.ne.s32.totalorder %s105, %s106
      %p117 = scmp.eq.s32.totalorder %s27, 0
      %p118 = por %p116, %p117
      %p119 = scmp.ne.s32.totalorder %s105, %s106
      %p120 = scmp.eq.s32.totalorder %s28, 1
      %p121 = por %p119, %p120
      %p123 = scmp.ne.s32.totalorder %s106, %s122
      %p124 = scmp.eq.s32.totalorder %s28, 0
      %p125 = por %p123, %p124
      %s126 = ssub.s32 %s29, %s41
      %s127 = ssub.s32 %s30, %s37
      %s128 = sor.u32 %s126, %s127
      %p129 = scmp.eq.s32.totalorder %s128, 0
      %s131 = sadd.s32 %s130, 1
      %s132 = scalar_select %p129, %s130, %s131
      %p135 = pneg %p129
      %p136 = scmp.eq.s32.totalorder %s22, 1
      %p137 = por %p135, %p136
      %p138 = scmp.ne.s32.totalorder %s130, %s133
      %p139 = scmp.eq.s32.totalorder %s22, 0
      %p140 = por %p138, %p139
      %p141 = scmp.ne.s32.totalorder %s130, %s133
      %p142 = scmp.eq.s32.totalorder %s27, 1
      %p143 = por %p141, %p142
      %p144 = scmp.ne.s32.totalorder %s133, %s134
      %p145 = scmp.eq.s32.totalorder %s27, 0
      %p146 = por %p144, %p145
      %p147 = scmp.ne.s32.totalorder %s133, %s134
      %p148 = scmp.eq.s32.totalorder %s28, 1
      %p149 = por %p147, %p148
      %p151 = scmp.ne.s32.totalorder %s134, %s150
      %p152 = scmp.eq.s32.totalorder %s28, 0
      %p153 = por %p151, %p152
      %p154 = scmp.le.s32.totalorder 1, %s22
      %p155 = scmp.lt.s32.totalorder %s22, 3
      %p156 = pnand %p154, %p155
      %p157 = pneg %p156
      // Predicated region
      $region9: #{tpu_custom_call.1} parent=5 // pred_check
        _
      $region10: #{tpu_custom_call.1} parent=5 // pred_check_branch
        %159 = sbr.rel (%p156) target = $region12
      $region11: #{tpu_custom_call.1} parent=5 // pred_region
        %s160 = ssub.s32 %s22, 1
      $region12: #{tpu_custom_call.1} parent=5 // pred_fallthru
        _
      %p161 = scmp.lt.s32.totalorder %s22, 2
      // Predicated region
      $region13: #{tpu_custom_call.1} parent=5 // pred_check
        %p162 = pneg %p161
      $region14: #{tpu_custom_call.1} parent=5 // pred_check_branch
        %164 = sbr.rel (%p162) target = $region16
      $region15: #{tpu_custom_call.1} parent=5 // pred_region
        // Predicated region
        $region17: #{tpu_custom_call.1} parent=15 // pred_check
          %p165 = pneg %p56
        $region18: #{tpu_custom_call.1} parent=15 // pred_check_branch
          %167 = sbr.rel (%p165) target = $region20
        $region19: #{tpu_custom_call.1} parent=15 // pred_region
          %s168 = sand.u32 %s46, 1
          %s169 = scalar_lea.sflag [#allocation3], %s168
          %s170 = sand.u32 %s46, 1
          %s171 = smul.addr %s170, 8
          %s172 = scalar_lea.vmem [#allocation2], %s171
          %s173 = smul.u32 2, %s30
          %s175 = ssub.s32 128, 128
          %176 = vsyncadd %s169, %s175
          %s177 = smul.addr %s29, 2
          %s178 = sadd.s32 %s173, %s177
          %s179 = smul.addr %s178, 64
          %s180 = scalar_lea.hbm %s0, %s179
          %s182 = sshll.u32 %s172, 4
          %s183 = int_to_ptr.vmem [resolvable:$true] %s182
          %185 = dma.hbm_to_vmem [thread:$0]  %s180, 128, %s183, %s169
        $region20: #{tpu_custom_call.1} parent=15 // pred_fallthru
          _
        // Predicated region
        $region21: #{tpu_custom_call.1} parent=15 // pred_check
          %p186 = pneg %p84
        $region22: #{tpu_custom_call.1} parent=15 // pred_check_branch
          %188 = sbr.rel (%p186) target = $region24
        $region23: #{tpu_custom_call.1} parent=15 // pred_region
          %s189 = sand.u32 %s74, 1
          %s190 = scalar_lea.sflag [#allocation6], %s189
          %s191 = sand.u32 %s74, 1
          %s192 = smul.addr %s191, 2
          %s193 = scalar_lea.vmem [#allocation5], %s192
          %s194 = smul.u32 2, %s30
          %s196 = ssub.s32 32, 32
          %197 = vsyncadd %s190, %s196
          %s198 = smul.addr %s29, 2
          %s199 = sadd.s32 %s194, %s198
          %s200 = smul.addr %s199, 16
          %s201 = scalar_lea.hbm %s1, %s200
          %s203 = sshll.u32 %s193, 4
          %s204 = int_to_ptr.vmem [resolvable:$true] %s203
          %206 = dma.hbm_to_vmem [thread:$0]  %s201, 32, %s204, %s190
        $region24: #{tpu_custom_call.1} parent=15 // pred_fallthru
          _
      $region16: #{tpu_custom_call.1} parent=5 // pred_fallthru
        _
      %p207 = scmp.le.s32.totalorder 1, %s22
      %p208 = scmp.lt.s32.totalorder %s22, 3
      %p209 = pnand %p207, %p208
      %p210 = pneg %p209
      // Predicated region
      $region25: #{tpu_custom_call.1} parent=5 // pred_check
        _
      $region26: #{tpu_custom_call.1} parent=5 // pred_check_branch
        %212 = sbr.rel (%p209) target = $region28
      $region27: #{tpu_custom_call.1} parent=5 // pred_region
        %s213 = ssub.s32 %s22, 1
        %s214 = sand.u32 %s49, 1
        %s215 = scalar_lea.sflag [#allocation3], %s214
        %s216 = sand.u32 %s49, 1
        %s217 = smul.addr %s216, 8
        %s218 = scalar_lea.vmem [#allocation2], %s217
        // Predicated region
        $region29: #{tpu_custom_call.1} parent=27 // pred_check
          %p219 = pneg %p62
        $region30: #{tpu_custom_call.1} parent=27 // pred_check_branch
          %221 = sbr.rel (%p219) target = $region32
        $region31: #{tpu_custom_call.1} parent=27 // pred_region
          %222 = dma.done %s215, 128
        $region32: #{tpu_custom_call.1} parent=27 // pred_fallthru
          _
        %s223 = sand.u32 %s77, 1
        %s224 = scalar_lea.sflag [#allocation6], %s223
        %s225 = sand.u32 %s77, 1
        %s226 = smul.addr %s225, 2
        %s227 = scalar_lea.vmem [#allocation5], %s226
        // Predicated region
        $region33: #{tpu_custom_call.1} parent=27 // pred_check
          %p228 = pneg %p90
        $region34: #{tpu_custom_call.1} parent=27 // pred_check_branch
          %230 = sbr.rel (%p228) target = $region36
        $region35: #{tpu_custom_call.1} parent=27 // pred_region
          %231 = dma.done %s224, 32
        $region36: #{tpu_custom_call.1} parent=27 // pred_fallthru
          _
        %s232 = sand.u32 %s49, 1
        %s233 = scalar_lea.sflag [#allocation3], %s232
        %s234 = sand.u32 %s49, 1
        %s235 = smul.addr %s234, 8
        %s236 = scalar_lea.vmem [#allocation2], %s235
        %p237 = pneg %p62
        %p238 = pneg %p59
        %s239 = sand.u32 %s77, 1
        %s240 = scalar_lea.sflag [#allocation6], %s239
        %s241 = sand.u32 %s77, 1
        %s242 = smul.addr %s241, 2
        %s243 = scalar_lea.vmem [#allocation5], %s242
        %p244 = pneg %p90
        %p245 = pneg %p87
        %p246 = pneg %p118
        %p247 = pneg %p115
        %s248 = sand.u32 %s105, 1
        %s249 = scalar_lea.sflag [#allocation4], %s248
        %s250 = sand.u32 %s105, 1
        %s251 = smul.addr %s250, 2
        %s252 = scalar_lea.vmem [#allocation7], %s251
        %p253 = pneg %p146
        %p254 = pneg %p143
        %s255 = sand.u32 %s133, 1
        %s256 = scalar_lea.sflag [#allocation9], %s255
        %s257 = sand.u32 %s133, 1
        %s258 = smul.addr %s257, 2
        %s259 = scalar_lea.vmem [#allocation8], %s258
        %s260 = smul.u32 2, %s32
        %s261 = smul.u32 2, %s32
        %s262 = smul.u32 2, %s32
        %s263 = smul.u32 2, %s32
        %v264 = vld [vmem:[%s218] sm:$0xff]
        %v265 = vld [vmem:[%s227] sm:$0x3]
        %vm266 = vcmp.ne.s32.totalorder %v265, 255
        %v267 = vlaneseq
        %v268 = vshrl.u32 %v267, 7
        %v269 = vlaneseq
        %v270 = vshrl.u32 %v269, 7
        %v271 = vsub.s32 0, %v270
        %v272 = vrot.slane %v265, %v271
        %v273 = vlaneseq
        %v274 = vshrl.u32 %v273, 7
        %v275 = vsub.s32 1, %v274
        %v276 = vrot.slane %v265, %v275
        %vm277 = vcmp.eq.s32.totalorder %v268, %v272
        %vm278 = vcmp.eq.s32.totalorder %v268, %v276
        %v279 = vsel %vm277, 1, 0
        %v280 = vsel %vm278, 1, 0
        %v281 = vcvt.s32.f32 %v279
        %v282 = vcvt.s32.f32 %v280
        %v284 = vcombine.high %v264, %v264
        %vm286 = vcmask 1043456
        %v287 = vsel %vm286, %v264, -inf
        %v288 = vrot.slane %v287, 4
        %v289 = vmax.f32 %v287, %v288
        %v290 = vrot.slane %v289, 2
        %v291 = vmax.f32 %v289, %v290
        %v292 = vrot.slane %v291, 1
        %v293 = vmax.f32 %v291, %v292
        %v294 = vsel %vm286, %v284, -inf
        %v295 = vrot.slane %v294, 4
        %v296 = vmax.f32 %v294, %v295
        %v297 = vrot.slane %v296, 2
        %v298 = vmax.f32 %v296, %v297
        %v299 = vrot.slane %v298, 1
        %v300 = vmax.f32 %v298, %v299
        %v303 = vcombine.low %v293, %v300
        %v305 = vsub.f32 %v264, %v303
        %v306 = vmul.f32 %v305, 1.442695
        %v307 = vpow.pop %v306
        %v309 = vcombine.high %v307, %v307
        %v311 = vsel %vm286, %v307, 0.0
        %v312 = vrot.slane %v311, 4
        %v313 = vadd.f32 %v311, %v312
        %v314 = vrot.slane %v313, 2
        %v315 = vadd.f32 %v313, %v314
        %v316 = vrot.slane %v315, 1
        %v317 = vadd.f32 %v315, %v316
        %v318 = vsel %vm286, %v309, 0.0
        %v319 = vrot.slane %v318, 4
        %v320 = vadd.f32 %v318, %v319
        %v321 = vrot.slane %v320, 2
        %v322 = vadd.f32 %v320, %v321
        %v323 = vrot.slane %v322, 1
        %v324 = vadd.f32 %v322, %v323
        %v325 = vlog2.pop %v317
        %v326 = vmul.f32 %v325, 0.6931472
        %v327 = vlog2.pop %v324
        %v328 = vmul.f32 %v327, 0.6931472
        %v329 = vadd.f32 %v293, %v326
        %v330 = vadd.f32 %v300, %v328
        %v333 = vcombine.low %v281, %v282
        %v335 = vmul.f32 %v264, %v333
        %v337 = vcombine.high %v335, %v335
        %v339 = vsel %vm286, %v335, 0.0
        %v340 = vrot.slane %v339, 4
        %v341 = vadd.f32 %v339, %v340
        %v342 = vrot.slane %v341, 2
        %v343 = vadd.f32 %v341, %v342
        %v344 = vrot.slane %v343, 1
        %v345 = vadd.f32 %v343, %v344
        %v346 = vsel %vm286, %v337, 0.0
        %v347 = vrot.slane %v346, 4
        %v348 = vadd.f32 %v346, %v347
        %v349 = vrot.slane %v348, 2
        %v350 = vadd.f32 %v348, %v349
        %v351 = vrot.slane %v350, 1
        %v352 = vadd.f32 %v350, %v351
        %v353 = vsub.f32 %v329, %v345
        %v354 = vsub.f32 %v330, %v352
        %v357 = vcombine.low %v353, %v354
        %v359 = vunpack.c.l.s4 1966171168
        %v360 = vunpack.c.0.s8 %v359
        %v361 = vlaneseq
        %v362 = vshrl.u32 %v361, 7
        %v363 = vsub.s32 %v360, %v362
        %v364 = vrot.slane %v357, %v363
        %v366 = vunpack.c.l.s4 1966171168
        %v367 = vunpack.c.0.s8 %v366
        %v368 = vlaneseq
        %v369 = vshrl.u32 %v368, 7
        %v370 = vsub.s32 %v367, %v369
        %v371 = vrot.slane %v364, %v370
        %v373 = vlaneseq
        %vm374 = vcmp.ge.s32.totalorder %v373, 0
        %vm375 = vcmp.lt.s32.totalorder %v373, 256
        %vm376 = vmand %vm374, %vm375
        %377 = vst.msk [vmem:[%s259] sm:$0x3] %vm376, %v371
        %v378 = vsub.f32 0.0, %v353
        %v379 = vsub.f32 0.0, %v354
        %v380 = vmul.f32 %v378, 1.442695
        %v381 = vpow.pop %v380
        %v382 = vmul.f32 %v379, 1.442695
        %v383 = vpow.pop %v382
        %v386 = vcombine.low %v381, %v383
        %v388 = vunpack.c.l.s4 1966171168
        %v389 = vunpack.c.0.s8 %v388
        %v390 = vlaneseq
        %v391 = vshrl.u32 %v390, 7
        %v392 = vsub.s32 %v389, %v391
        %v393 = vrot.slane %v386, %v392
        %v395 = vunpack.c.l.s4 1966171168
        %v396 = vunpack.c.0.s8 %v395
        %v397 = vlaneseq
        %v398 = vshrl.u32 %v397, 7
        %v399 = vsub.s32 %v396, %v398
        %v400 = vrot.slane %v393, %v399
        %v402 = vsel %vm266, %v400, 1.0
        %403 = vst.msk [vmem:[%s252] sm:$0x3] %vm376, %v402
        %s404 = sand.u32 %s105, 1
        %s405 = scalar_lea.sflag [#allocation4], %s404
        %s406 = sand.u32 %s105, 1
        %s407 = smul.addr %s406, 2
        %s408 = scalar_lea.vmem [#allocation7], %s407
        %s409 = sand.u32 %s133, 1
        %s410 = scalar_lea.sflag [#allocation9], %s409
        %s411 = sand.u32 %s133, 1
        %s412 = smul.addr %s411, 2
        %s413 = scalar_lea.vmem [#allocation8], %s412
        // Predicated region
        $region37: #{tpu_custom_call.1} parent=27 // pred_check
          %p414 = pneg %p115
        $region38: #{tpu_custom_call.1} parent=27 // pred_check_branch
          %416 = sbr.rel (%p414) target = $region40
        $region39: #{tpu_custom_call.1} parent=27 // pred_region
          %s417 = smul.u32 2, %s32
          %s419 = ssub.s32 32, 32
          %420 = vsyncadd %s405, %s419
          %s421 = smul.addr %s31, 2
          %s422 = sadd.s32 %s417, %s421
          %s423 = smul.addr %s422, 16
          %s424 = scalar_lea.hbm %s2, %s423
          %s426 = sshll.u32 %s408, 4
          %s427 = int_to_ptr.vmem [resolvable:$true] %s426
          %429 = dma.vmem_to_hbm [thread:$0]  %s427, 32, %s424, %s405
        $region40: #{tpu_custom_call.1} parent=27 // pred_fallthru
          _
        // Predicated region
        $region41: #{tpu_custom_call.1} parent=27 // pred_check
          %p430 = pneg %p143
        $region42: #{tpu_custom_call.1} parent=27 // pred_check_branch
          %432 = sbr.rel (%p430) target = $region44
        $region43: #{tpu_custom_call.1} parent=27 // pred_region
          %s433 = smul.u32 2, %s32
          %s435 = ssub.s32 32, 32
          %436 = vsyncadd %s410, %s435
          %s437 = smul.addr %s31, 2
          %s438 = sadd.s32 %s433, %s437
          %s439 = smul.addr %s438, 16
          %s440 = scalar_lea.hbm %s3, %s439
          %s442 = sshll.u32 %s413, 4
          %s443 = int_to_ptr.vmem [resolvable:$true] %s442
          %445 = dma.vmem_to_hbm [thread:$0]  %s443, 32, %s440, %s410
        $region44: #{tpu_custom_call.1} parent=27 // pred_fallthru
          _
      $region28: #{tpu_custom_call.1} parent=5 // pred_fallthru
        _
      %p446 = scmp.le.s32.totalorder 2, %s22
      // Predicated region
      $region45: #{tpu_custom_call.1} parent=5 // pred_check
        %p447 = pneg %p446
      $region46: #{tpu_custom_call.1} parent=5 // pred_check_branch
        %449 = sbr.rel (%p447) target = $region48
      $region47: #{tpu_custom_call.1} parent=5 // pred_region
        %s450 = ssub.s32 %s22, 2
        // Predicated region
        $region49: #{tpu_custom_call.1} parent=47 // pred_check
          %p451 = pneg %p121
        $region50: #{tpu_custom_call.1} parent=47 // pred_check_branch
          %453 = sbr.rel (%p451) target = $region52
        $region51: #{tpu_custom_call.1} parent=47 // pred_region
          %s454 = sand.u32 %s106, 1
          %s455 = scalar_lea.sflag [#allocation4], %s454
          %s456 = sand.u32 %s106, 1
          %s457 = smul.addr %s456, 2
          %s458 = scalar_lea.vmem [#allocation7], %s457
          %459 = dma.done %s455, 32
        $region52: #{tpu_custom_call.1} parent=47 // pred_fallthru
          _
        // Predicated region
        $region53: #{tpu_custom_call.1} parent=47 // pred_check
          %p460 = pneg %p149
        $region54: #{tpu_custom_call.1} parent=47 // pred_check_branch
          %462 = sbr.rel (%p460) target = $region56
        $region55: #{tpu_custom_call.1} parent=47 // pred_region
          %s463 = sand.u32 %s134, 1
          %s464 = scalar_lea.sflag [#allocation9], %s463
          %s465 = sand.u32 %s134, 1
          %s466 = smul.addr %s465, 2
          %s467 = scalar_lea.vmem [#allocation8], %s466
          %468 = dma.done %s464, 32
        $region56: #{tpu_custom_call.1} parent=47 // pred_fallthru
          _
      $region48: #{tpu_custom_call.1} parent=5 // pred_fallthru
        _
    $region6: #{tpu_custom_call.1} parent=1 // loop_footer
      %s26 = sadd.s32 1, %s22
    $region7: #{tpu_custom_call.1} parent=1 // loop_footer_branch
      %21 = sbr.rel target = $region3
    $region8: #{tpu_custom_call.1} parent=1 // loop_exit
      _
    %469 = vsyncpa [#allocation3], 1
    %s470 = scalar_lea.sflag [#allocation3], 1
    %471 = vsyncpa %s470, 1
    %472 = vsyncpa [#allocation6], 1
    %s473 = scalar_lea.sflag [#allocation6], 1
    %474 = vsyncpa %s473, 1
    %475 = vsyncpa [#allocation4], 1
    %s476 = scalar_lea.sflag [#allocation4], 1
    %477 = vsyncpa %s476, 1
    %478 = vsyncpa [#allocation9], 1
    %s479 = scalar_lea.sflag [#allocation9], 1
    %480 = vsyncpa %s479, 1

</llo_original>
